<compile_context>
chip_gen: v5e
topology: v5e:2x2
jax: 0.10.0
libtpu: 0.0.40
codegen_flags: <defaults>
</compile_context>

<pallas_src>
import jax
import jax.numpy as jnp
from jax import lax
from jax.experimental import pallas as pl
from jax.experimental.pallas import tpu as pltpu


def film_kernel(x_ref, cond_ref, wg_ref, wb_ref, out_ref):
    # x: (TB, dim_out), cond: (TB, dim), wg/wb: (dim, dim_out)  (pre-transposed)
    cond = cond_ref[...]
    gamma = lax.dot_general(
        cond, wg_ref[...],
        dimension_numbers=(((1,), (0,)), ((), ())),
        preferred_element_type=jnp.float32,
    )  # (TB, dim_out), f32 accumulation
    beta = lax.dot_general(
        cond, wb_ref[...],
        dimension_numbers=(((1,), (0,)), ((), ())),
        preferred_element_type=jnp.float32,
    )
    x = x_ref[...].astype(jnp.float32)
    # x * (gamma + 1) + beta  ==  x * gamma + x + beta  (consume gamma/beta now)
    out_ref[...] = (x * gamma + x + beta).astype(out_ref.dtype)


def _round_up8(n):
    return ((n + 7) // 8) * 8


def _weight_spec(dim, dim_out):
    """Resident weight spec; single-buffered when the JAX version supports it."""
    try:
        spec = pl.BlockSpec((dim, dim_out), lambda i: (0, 0),
                            pipeline_mode=pl.Buffered(1))
        return spec, 1
    except (AttributeError, TypeError):
        # Older JAX: fall back to default (double-buffered) pipelining.
        return pl.BlockSpec((dim, dim_out), lambda i: (0, 0)), 2


def film(x, cond, w_gamma, w_beta, *, tb=None):
    """FiLM forward.

    x: (..., dim_out), cond: (..., dim),
    w_gamma / w_beta: (dim_out, dim)  (nn.Linear weight layout).
    """
    *lead, dim_out = x.shape
    dim = cond.shape[-1]
    x2 = x.reshape(-1, dim_out)
    cond2 = cond.reshape(-1, dim)
    B = x2.shape[0]

    # Pre-transpose once to the MXU-native (dim, dim_out) RHS layout.  Callers
    # that re-use the weights across steps should hoist this outside the hot
    # path / jit so it is materialized only once.
    wg_t = w_gamma.T
    wb_t = w_beta.T

    itemsize = x2.dtype.itemsize
    w_itemsize = wg_t.dtype.itemsize

    wg_spec, n_wbuf = _weight_spec(dim, dim_out)
    wb_spec, _ = _weight_spec(dim, dim_out)

    # --- batch tile selection -------------------------------------------------
    # Per-row VMEM cost: x + cond + out tiles (double-buffered) plus the f32
    # gamma/beta/x intermediates.  Resident weights are charged separately.
    per_row = 2 * (dim + 2 * dim_out) * itemsize + 3 * dim_out * 4
    w_resident = 2 * dim * dim_out * w_itemsize * n_wbuf
    budget = 40 * 1024 * 1024  # conservative: leaves headroom on v7x (64 MiB/TC)
    if tb is None:
        avail = budget - w_resident
        if avail < 8 * per_row:
            # TODO(synk): weights alone nearly fill the budget; tile dim_out (N)
            # and/or cast weights to bf16 instead of collapsing the batch tile.
            avail = 8 * per_row
        tb = int(min(512, avail // per_row))
    tb = min(tb, B)
    # v7x megacore: aim for >= 2 batch tiles so the "parallel" axis shards
    # across both TensorCores (no-op for single-TC v5e/v6e correctness).
    if B >= 16:
        tb = min(tb, _round_up8(pl.cdiv(B, 2)))
    if tb < B:
        tb = max(8, (tb // 8) * 8)  # (8, 128) constraint on partial tiles

    grid = (pl.cdiv(B, tb),)

    # Explicit scoped-VMEM limit derived from the actual requirement
    # (raises v5e/v6e's small defaults, stays under v7x's 64 MiB/TC).
    need = w_resident + 2 * tb * (dim + 2 * dim_out) * itemsize + 3 * tb * dim_out * 4
    vmem_limit = int(min(max(int(need * 1.5), 32 * 1024 * 1024), 60 * 1024 * 1024))

    cost = pl.CostEstimate(
        flops=4 * B * dim * dim_out + 3 * B * dim_out,
        transcendentals=0,
        bytes_accessed=B * (dim + 2 * dim_out) * itemsize
        + 2 * dim * dim_out * w_itemsize,
    )

    out = pl.pallas_call(
        film_kernel,
        out_shape=jax.ShapeDtypeStruct((B, dim_out), x.dtype),
        grid_spec=pltpu.PrefetchScalarGridSpec(
            num_scalar_prefetch=0,
            grid=grid,
            in_specs=[
                pl.BlockSpec((tb, dim_out), lambda i: (i, 0)),  # x tile
                pl.BlockSpec((tb, dim), lambda i: (i, 0)),      # cond tile
                wg_spec,                                        # resident Wg^T
                wb_spec,                                        # resident Wb^T
            ],
            out_specs=pl.BlockSpec((tb, dim_out), lambda i: (i, 0)),
        ),
        compiler_params=pltpu.CompilerParams(
            dimension_semantics=("parallel",),  # v7x: shard batch tiles across TCs
            vmem_limit_bytes=vmem_limit,
        ),
        cost_estimate=cost,
    )(x2, cond2, wg_t, wb_t)

    return out.reshape(*lead, dim_out)


if __name__ == "__main__":
    key = jax.random.PRNGKey(0)
    k_x, k_c, k_wg, k_wb = jax.random.split(key, 4)

    batch, seq, dim, dim_out = 2, 8, 64, 128

    x = jax.random.normal(k_x, (batch, seq, dim_out), dtype=jnp.float32)
    cond = jax.random.normal(k_c, (batch, seq, dim), dtype=jnp.float32)
    # nn.Linear(dim, dim_out, bias=False).weight has shape (dim_out, dim).
    w_gamma = jax.random.normal(k_wg, (dim_out, dim), dtype=jnp.float32) * 0.02
    w_beta = jax.random.normal(k_wb, (dim_out, dim), dtype=jnp.float32) * 0.02

    # Pure-JAX reference of the PyTorch forward.
    gamma_ref = cond @ w_gamma.T
    beta_ref = cond @ w_beta.T
    ref = x * (gamma_ref + 1.0) + beta_ref

    # 1) Default tiling (>= 2 batch tiles thanks to the megacore cap).
    out = jax.block_until_ready(film(x, cond, w_gamma, w_beta))
    assert out.shape == ref.shape
    assert jnp.allclose(out, ref, atol=1e-5, rtol=1e-5)

    # 2) Explicit small tile (tb=8 -> 2 batch tiles) to exercise the pipelined
    #    path with resident, single-buffered weights.
    out_tiled = jax.block_until_ready(film(x, cond, w_gamma, w_beta, tb=8))
    assert jnp.allclose(out_tiled, ref, atol=1e-5, rtol=1e-5)

    # 3) Zero-init weights (the module's actual init): FiLM is the identity.
    zeros_w = jnp.zeros((dim_out, dim), dtype=jnp.float32)
    out_id = jax.block_until_ready(film(x, cond, zeros_w, zeros_w))
    assert jnp.allclose(out_id, x, atol=1e-6, rtol=1e-6)

    # 4) bf16 I/O path (halves HBM traffic; in-kernel math stays f32).
    out_bf16 = jax.block_until_ready(
        film(x.astype(jnp.bfloat16), cond.astype(jnp.bfloat16),
             w_gamma.astype(jnp.bfloat16), w_beta.astype(jnp.bfloat16))
    )
    assert jnp.allclose(out_bf16.astype(jnp.float32), ref, atol=5e-2, rtol=5e-2)

    print("KERNEL_OK")
</pallas_src>

<mosaic_0001>
module attributes {stable_mosaic.version = 11 : i64} {
  func.func @film_kernel(%arg0: i32, %arg1: memref<8x128xf32, #tpu.memory_space<vmem>>, %arg2: memref<8x64xf32, #tpu.memory_space<vmem>>, %arg3: memref<64x128xf32, #tpu.memory_space<vmem>>, %arg4: memref<64x128xf32, #tpu.memory_space<vmem>>, %arg5: memref<8x128xf32, #tpu.memory_space<vmem>>) attributes {dimension_semantics = [#tpu.dimension_semantics<parallel>], iteration_bounds = array<i64: 2>, scalar_prefetch = 0 : i64, scratch_operands = 0 : i64, tpu.core_type = #tpu.core_type<tc>, window_params = [{transform_indices = @transform_0, window_bounds = array<i64: 8, 128>}, {transform_indices = @transform_1, window_bounds = array<i64: 8, 64>}, {pipeline_mode = #tpu.pipeline_mode<synchronous>, transform_indices = @transform_2, window_bounds = array<i64: 64, 128>}, {pipeline_mode = #tpu.pipeline_mode<synchronous>, transform_indices = @transform_3, window_bounds = array<i64: 64, 128>}, {transform_indices = @transform_4, window_bounds = array<i64: 8, 128>}]} {
    %c0 = arith.constant 0 : index
    %c0_0 = arith.constant 0 : index
    %0 = vector.load %arg2[%c0, %c0_0] : memref<8x64xf32, #tpu.memory_space<vmem>>, vector<8x64xf32>
    %c0_1 = arith.constant 0 : index
    %c0_2 = arith.constant 0 : index
    %1 = vector.load %arg3[%c0_1, %c0_2] : memref<64x128xf32, #tpu.memory_space<vmem>>, vector<64x128xf32>
    %cst = arith.constant dense<0.000000e+00> : vector<8x128xf32>
    %2 = tpu.matmul %0, %1, %cst {dimension_numbers = #tpu.dot_dimension_numbers<[1], [0], [0], [1], [0, 0, 1, 1], [], []>} : vector<8x64xf32>, vector<64x128xf32>, vector<8x128xf32> -> vector<8x128xf32>
    %c0_3 = arith.constant 0 : index
    %c0_4 = arith.constant 0 : index
    %3 = vector.load %arg4[%c0_3, %c0_4] : memref<64x128xf32, #tpu.memory_space<vmem>>, vector<64x128xf32>
    %cst_5 = arith.constant dense<0.000000e+00> : vector<8x128xf32>
    %4 = tpu.matmul %0, %3, %cst_5 {dimension_numbers = #tpu.dot_dimension_numbers<[1], [0], [0], [1], [0, 0, 1, 1], [], []>} : vector<8x64xf32>, vector<64x128xf32>, vector<8x128xf32> -> vector<8x128xf32>
    %c0_6 = arith.constant 0 : index
    %c0_7 = arith.constant 0 : index
    %5 = vector.load %arg1[%c0_6, %c0_7] : memref<8x128xf32, #tpu.memory_space<vmem>>, vector<8x128xf32>
    %6 = arith.mulf %5, %2 : vector<8x128xf32>
    %7 = arith.addf %6, %5 : vector<8x128xf32>
    %8 = arith.addf %7, %4 : vector<8x128xf32>
    %c0_8 = arith.constant 0 : index
    %c0_9 = arith.constant 0 : index
    %9 = vector.load %arg5[%c0_8, %c0_9] : memref<8x128xf32, #tpu.memory_space<vmem>>, vector<8x128xf32>
    tpu.vector_store %arg5[%c0_8, %c0_9], %8 {strides = array<i32>} : memref<8x128xf32, #tpu.memory_space<vmem>>, vector<8x128xf32>,
    return
  }
  func.func @transform_0(%arg0: i32) -> (i32, i32) {
    %c0_i32 = arith.constant 0 : i32
    %c0_i32_0 = arith.constant 0 : i32
    return %arg0, %c0_i32 : i32, i32
  }
  func.func @transform_1(%arg0: i32) -> (i32, i32) {
    %c0_i32 = arith.constant 0 : i32
    %c0_i32_0 = arith.constant 0 : i32
    return %arg0, %c0_i32 : i32, i32
  }
  func.func @transform_2(%arg0: i32) -> (i32, i32) {
    %c0_i32 = arith.constant 0 : i32
    %c0_i32_0 = arith.constant 0 : i32
    %c0_i32_1 = arith.constant 0 : i32
    return %c0_i32, %c0_i32_0 : i32, i32
  }
  func.func @transform_3(%arg0: i32) -> (i32, i32) {
    %c0_i32 = arith.constant 0 : i32
    %c0_i32_0 = arith.constant 0 : i32
    %c0_i32_1 = arith.constant 0 : i32
    return %c0_i32, %c0_i32_0 : i32, i32
  }
  func.func @transform_4(%arg0: i32) -> (i32, i32) {
    %c0_i32 = arith.constant 0 : i32
    %c0_i32_0 = arith.constant 0 : i32
    return %arg0, %c0_i32 : i32, i32
  }
}

</mosaic_0001>

<llo_original>
// kernel: tpu_custom_call.1
$region0: #{tpu_custom_call.1}
  #allocation0 [shape = 'u32[]', space=smem, size = 0x4, offset = 0x4, fixed_abs, tag = 'smem constant byte address 0x4 - core index']
  #allocation1 [shape = 'u32[72,128]{1,0:T(1,128)}', space=vmem, size = 0x9000, scoped, tag = 'internal scratch']
  %s0 = inlined_call_operand.hbm [shape: f32[16,128], index: 0, kind: input, shape index: {}]
  %s1 = inlined_call_operand.hbm [shape: f32[16,64], index: 1, kind: input, shape index: {}]
  %s2 = inlined_call_operand.hbm [shape: f32[64,128], index: 2, kind: input, shape index: {}]
  %s3 = inlined_call_operand.hbm [shape: f32[64,128], index: 3, kind: input, shape index: {}]
  %s4 = inlined_call_operand.hbm [shape: f32[16,128], index: 4, kind: output, shape index: {}]
  %s5 = sld [smem:[#allocation0]]
  $region65: #{tpu_custom_call.1} parent=0
    _
  %s7 = ssub.s32 1, %s5
  %s8 = scalar_select 0, %s7, %s5
  $region1: #{tpu_custom_call.1} parent=0
    #allocation2 [shape = 'u8[8192]{0}', space=vmem, size = 0x2000, scoped, tag = 'input window, operand 0']
    #allocation3 [shape = 's32[2]{0}', space=sflag, size = 0x8, scoped, tag = 'scoped memory for tpu_custom_call.1']
    #allocation4 [shape = 's32[2]{0}', space=sflag, size = 0x8, scoped, tag = 'scoped memory for tpu_custom_call.1']
    #allocation5 [shape = 'u8[8192]{0}', space=vmem, size = 0x2000, scoped, tag = 'input window, operand 1']
    #allocation6 [shape = 's32[2]{0}', space=sflag, size = 0x8, scoped, tag = 'scoped memory for tpu_custom_call.1']
    #allocation7 [shape = 'u8[32768]{0}', space=vmem, size = 0x8000, scoped, tag = 'input window, operand 2, single buffered']
    #allocation8 [shape = 'u8[32768]{0}', space=vmem, size = 0x8000, scoped, tag = 'input window, operand 3, single buffered']
    #allocation9 [shape = 's32[1]{0}', space=sflag, size = 0x4, scoped, tag = 'scoped memory for tpu_custom_call.1']
    #allocation10 [shape = 'u8[8192]{0}', space=vmem, size = 0x2000, scoped, tag = 'output window, operand 0']
    %9 = vsyncpa [#allocation3], 0
    %s10 = scalar_lea.sflag [#allocation3], 1
    %11 = vsyncpa %s10, 0
    %12 = vsyncpa [#allocation6], 0
    %s13 = scalar_lea.sflag [#allocation6], 1
    %14 = vsyncpa %s13, 0
    %15 = vsyncpa [#allocation9], 0
    %16 = vsyncpa [#allocation4], 0
    %s17 = scalar_lea.sflag [#allocation4], 1
    %18 = vsyncpa %s17, 0
    loop: start=0, step=1, limit=4
    $region2: #{tpu_custom_call.1} parent=1 // loop_pre_header
      _
    $region3: #{tpu_custom_call.1} parent=1 // loop_header
      %s20 = sphi 0, %s24
      %p21 = scmp.ge.s32.totalorder %s20, 4
      %s30 = sphi 0, %s32
      %s33 = sphi 0, %s30
      %s34 = sphi 0, %s33
      %s50 = sphi 0, %s34
      %s56 = sphi 0, %s58
      %s59 = sphi 0, %s56
      %s60 = sphi 0, %s59
      %s76 = sphi 0, %s60
      %s80 = sphi 0, %s80
      %s82 = sphi 0, %s80
      %s83 = sphi 0, %s82
      %s97 = sphi 0, %s83
      %s101 = sphi 0, %s101
      %s103 = sphi 0, %s101
      %s104 = sphi 0, %s103
      %s118 = sphi 0, %s104
      %s124 = sphi 0, %s126
      %s127 = sphi 0, %s124
      %s128 = sphi 0, %s127
      %s144 = sphi 0, %s128
    $region4: #{tpu_custom_call.1} parent=1 // loop_header_branch
      %23 = sbr.rel (%p21) target = $region8
    $region5: #{tpu_custom_call.1} parent=1 // loop_body
      %s25 = ssub.s32 %s20, 1
      %s26 = ssub.s32 %s20, 2
      %s27 = sadd.s32 %s20, 1
      %s28 = ssub.s32 %s20, %s27
      %p29 = scmp.eq.s32.totalorder %s28, 0
      %s31 = sadd.s32 %s30, 1
      %s32 = scalar_select %p29, %s30, %s31
      %p35 = pneg %p29
      %p36 = scmp.eq.s32.totalorder %s20, 1
      %p37 = por %p35, %p36
      %p38 = scmp.ne.s32.totalorder %s30, %s33
      %p39 = scmp.eq.s32.totalorder %s20, 0
      %p40 = por %p38, %p39
      %p41 = scmp.ne.s32.totalorder %s30, %s33
      %p42 = scmp.eq.s32.totalorder %s25, 1
      %p43 = por %p41, %p42
      %p44 = scmp.ne.s32.totalorder %s33, %s34
      %p45 = scmp.eq.s32.totalorder %s25, 0
      %p46 = por %p44, %p45
      %p47 = scmp.ne.s32.totalorder %s33, %s34
      %p48 = scmp.eq.s32.totalorder %s26, 1
      %p49 = por %p47, %p48
      %p51 = scmp.ne.s32.totalorder %s34, %s50
      %p52 = scmp.eq.s32.totalorder %s26, 0
      %p53 = por %p51, %p52
      %s54 = ssub.s32 %s20, %s27
      %p55 = scmp.eq.s32.totalorder %s54, 0
      %s57 = sadd.s32 %s56, 1
      %s58 = scalar_select %p55, %s56, %s57
      %p61 = pneg %p55
      %p62 = scmp.eq.s32.totalorder %s20, 1
      %p63 = por %p61, %p62
      %p64 = scmp.ne.s32.totalorder %s56, %s59
      %p65 = scmp.eq.s32.totalorder %s20, 0
      %p66 = por %p64, %p65
      %p67 = scmp.ne.s32.totalorder %s56, %s59
      %p68 = scmp.eq.s32.totalorder %s25, 1
      %p69 = por %p67, %p68
      %p70 = scmp.ne.s32.totalorder %s59, %s60
      %p71 = scmp.eq.s32.totalorder %s25, 0
      %p72 = por %p70, %p71
      %p73 = scmp.ne.s32.totalorder %s59, %s60
      %p74 = scmp.eq.s32.totalorder %s26, 1
      %p75 = por %p73, %p74
      %p77 = scmp.ne.s32.totalorder %s60, %s76
      %p78 = scmp.eq.s32.totalorder %s26, 0
      %p79 = por %p77, %p78
      %s81 = sadd.s32 %s80, 1
      %p84 = scmp.eq.s32.totalorder %s20, 1
      %p85 = scmp.ne.s32.totalorder %s80, %s82
      %p86 = scmp.eq.s32.totalorder %s20, 0
      %p87 = por %p85, %p86
      %p88 = scmp.ne.s32.totalorder %s80, %s82
      %p89 = scmp.eq.s32.totalorder %s25, 1
      %p90 = por %p88, %p89
      %p91 = scmp.ne.s32.totalorder %s82, %s83
      %p92 = scmp.eq.s32.totalorder %s25, 0
      %p93 = por %p91, %p92
      %p94 = scmp.ne.s32.totalorder %s82, %s83
      %p95 = scmp.eq.s32.totalorder %s26, 1
      %p96 = por %p94, %p95
      %p98 = scmp.ne.s32.totalorder %s83, %s97
      %p99 = scmp.eq.s32.totalorder %s26, 0
      %p100 = por %p98, %p99
      %s102 = sadd.s32 %s101, 1
      %p105 = scmp.eq.s32.totalorder %s20, 1
      %p106 = scmp.ne.s32.totalorder %s101, %s103
      %p107 = scmp.eq.s32.totalorder %s20, 0
      %p108 = por %p106, %p107
      %p109 = scmp.ne.s32.totalorder %s101, %s103
      %p110 = scmp.eq.s32.totalorder %s25, 1
      %p111 = por %p109, %p110
      %p112 = scmp.ne.s32.totalorder %s103, %s104
      %p113 = scmp.eq.s32.totalorder %s25, 0
      %p114 = por %p112, %p113
      %p115 = scmp.ne.s32.totalorder %s103, %s104
      %p116 = scmp.eq.s32.totalorder %s26, 1
      %p117 = por %p115, %p116
      %p119 = scmp.ne.s32.totalorder %s104, %s118
      %p120 = scmp.eq.s32.totalorder %s26, 0
      %p121 = por %p119, %p120
      %s122 = ssub.s32 %s20, %s27
      %p123 = scmp.eq.s32.totalorder %s122, 0
      %s125 = sadd.s32 %s124, 1
      %s126 = scalar_select %p123, %s124, %s125
      %p129 = pneg %p123
      %p130 = scmp.eq.s32.totalorder %s20, 1
      %p131 = por %p129, %p130
      %p132 = scmp.ne.s32.totalorder %s124, %s127
      %p133 = scmp.eq.s32.totalorder %s20, 0
      %p134 = por %p132, %p133
      %p135 = scmp.ne.s32.totalorder %s124, %s127
      %p136 = scmp.eq.s32.totalorder %s25, 1
      %p137 = por %p135, %p136
      %p138 = scmp.ne.s32.totalorder %s127, %s128
      %p139 = scmp.eq.s32.totalorder %s25, 0
      %p140 = por %p138, %p139
      %p141 = scmp.ne.s32.totalorder %s127, %s128
      %p142 = scmp.eq.s32.totalorder %s26, 1
      %p143 = por %p141, %p142
      %p145 = scmp.ne.s32.totalorder %s128, %s144
      %p146 = scmp.eq.s32.totalorder %s26, 0
      %p147 = por %p145, %p146
      %p148 = scmp.le.s32.totalorder 1, %s20
      %p149 = scmp.lt.s32.totalorder %s20, 3
      %p150 = pnand %p148, %p149
      %p151 = pneg %p150
      // Predicated region
      $region9: #{tpu_custom_call.1} parent=5 // pred_check
        _
      $region10: #{tpu_custom_call.1} parent=5 // pred_check_branch
        %153 = sbr.rel (%p150) target = $region12
      $region11: #{tpu_custom_call.1} parent=5 // pred_region
        %s154 = ssub.s32 %s20, 1
        // Predicated region
        $region13: #{tpu_custom_call.1} parent=11 // pred_check
          %p155 = pneg %p93
        $region14: #{tpu_custom_call.1} parent=11 // pred_check_branch
          %157 = sbr.rel (%p155) target = $region16
        $region15: #{tpu_custom_call.1} parent=11 // pred_region
          %159 = vsyncadd [#allocation6], 0
          %s160 = sshll.u32 %s2, 4
          %s161 = int_to_ptr.hbm [resolvable:$true] %s160
          %s162 = sshll.u32 [#allocation7], 4
          %s163 = int_to_ptr.vmem [resolvable:$true] %s162
          %168 = dma.hbm_to_vmem [thread:$0]  %s161, 1024, %s163, [#allocation6], 128, 128, 8
        $region16: #{tpu_custom_call.1} parent=11 // pred_fallthru
          _
        // Predicated region
        $region17: #{tpu_custom_call.1} parent=11 // pred_check
          %p169 = pneg %p114
        $region18: #{tpu_custom_call.1} parent=11 // pred_check_branch
          %171 = sbr.rel (%p169) target = $region20
        $region19: #{tpu_custom_call.1} parent=11 // pred_region
          %173 = vsyncadd [#allocation9], 0
          %s174 = sshll.u32 %s3, 4
          %s175 = int_to_ptr.hbm [resolvable:$true] %s174
          %s176 = sshll.u32 [#allocation8], 4
          %s177 = int_to_ptr.vmem [resolvable:$true] %s176
          %182 = dma.hbm_to_vmem [thread:$0]  %s175, 1024, %s177, [#allocation9], 128, 128, 8
        $region20: #{tpu_custom_call.1} parent=11 // pred_fallthru
          _
      $region12: #{tpu_custom_call.1} parent=5 // pred_fallthru
        _
      %p183 = scmp.lt.s32.totalorder %s20, 2
      // Predicated region
      $region21: #{tpu_custom_call.1} parent=5 // pred_check
        %p184 = pneg %p183
      $region22: #{tpu_custom_call.1} parent=5 // pred_check_branch
        %186 = sbr.rel (%p184) target = $region24
      $region23: #{tpu_custom_call.1} parent=5 // pred_region
        // Predicated region
        $region25: #{tpu_custom_call.1} parent=23 // pred_check
          %p187 = pneg %p40
        $region26: #{tpu_custom_call.1} parent=23 // pred_check_branch
          %189 = sbr.rel (%p187) target = $region28
        $region27: #{tpu_custom_call.1} parent=23 // pred_region
          %s190 = sand.u32 %s30, 1
          %s191 = scalar_lea.sflag [#allocation3], %s190
          %s192 = sand.u32 %s30, 1
          %s193 = smul.addr %s192, 8
          %s194 = scalar_lea.vmem [#allocation2], %s193
          %196 = vsyncadd %s191, 0
          %s197 = smul.addr %s20, 8
          %s198 = scalar_lea.hbm %s0, %s197
          %s200 = sshll.u32 %s198, 4
          %s201 = int_to_ptr.hbm [resolvable:$true] %s200
          %s202 = sshll.u32 %s194, 4
          %s203 = int_to_ptr.vmem [resolvable:$true] %s202
          %205 = dma.hbm_to_vmem [thread:$0]  %s201, 128, %s203, %s191
        $region28: #{tpu_custom_call.1} parent=23 // pred_fallthru
          _
        // Predicated region
        $region29: #{tpu_custom_call.1} parent=23 // pred_check
          %p206 = pneg %p66
        $region30: #{tpu_custom_call.1} parent=23 // pred_check_branch
          %208 = sbr.rel (%p206) target = $region32
        $region31: #{tpu_custom_call.1} parent=23 // pred_region
          %s209 = sand.u32 %s20, 1
          %s210 = scalar_lea.sflag [#allocation6], %s209
          %s211 = sand.u32 %s56, 1
          %s212 = smul.addr %s211, 8
          %s213 = scalar_lea.vmem [#allocation5], %s212
          %215 = vsyncadd %s210, 0
          %s216 = smul.addr %s20, 8
          %s217 = scalar_lea.hbm %s1, %s216
          %s219 = sshll.u32 %s217, 4
          %s220 = int_to_ptr.hbm [resolvable:$true] %s219
          %s221 = sshll.u32 %s213, 4
          %s222 = int_to_ptr.vmem [resolvable:$true] %s221
          %224 = dma.hbm_to_vmem [thread:$0]  %s220, 128, %s222, %s210
        $region32: #{tpu_custom_call.1} parent=23 // pred_fallthru
          _
      $region24: #{tpu_custom_call.1} parent=5 // pred_fallthru
        _
      %p225 = scmp.le.s32.totalorder 1, %s20
      %p226 = scmp.lt.s32.totalorder %s20, 3
      %p227 = pnand %p225, %p226
      %p228 = pneg %p227
      // Predicated region
      $region33: #{tpu_custom_call.1} parent=5 // pred_check
        _
      $region34: #{tpu_custom_call.1} parent=5 // pred_check_branch
        %230 = sbr.rel (%p227) target = $region36
      $region35: #{tpu_custom_call.1} parent=5 // pred_region
        %s231 = ssub.s32 %s20, 1
        %s232 = sand.u32 %s33, 1
        %s233 = scalar_lea.sflag [#allocation3], %s232
        %s234 = sand.u32 %s33, 1
        %s235 = smul.addr %s234, 8
        %s236 = scalar_lea.vmem [#allocation2], %s235
        // Predicated region
        $region37: #{tpu_custom_call.1} parent=35 // pred_check
          %p237 = pneg %p46
        $region38: #{tpu_custom_call.1} parent=35 // pred_check_branch
          %239 = sbr.rel (%p237) target = $region40
        $region39: #{tpu_custom_call.1} parent=35 // pred_region
          %241 = dma.done %s233, 128
        $region40: #{tpu_custom_call.1} parent=35 // pred_fallthru
          _
        %s242 = sand.u32 %s25, 1
        %s243 = scalar_lea.sflag [#allocation6], %s242
        %s244 = sand.u32 %s59, 1
        %s245 = smul.addr %s244, 8
        %s246 = scalar_lea.vmem [#allocation5], %s245
        // Predicated region
        $region41: #{tpu_custom_call.1} parent=35 // pred_check
          %p247 = pneg %p72
        $region42: #{tpu_custom_call.1} parent=35 // pred_check_branch
          %249 = sbr.rel (%p247) target = $region44
        $region43: #{tpu_custom_call.1} parent=35 // pred_region
          %251 = dma.done %s243, 128
        $region44: #{tpu_custom_call.1} parent=35 // pred_fallthru
          _
        // Predicated region
        $region45: #{tpu_custom_call.1} parent=35 // pred_check
          %p252 = pneg %p93
        $region46: #{tpu_custom_call.1} parent=35 // pred_check_branch
          %254 = sbr.rel (%p252) target = $region48
        $region47: #{tpu_custom_call.1} parent=35 // pred_region
          %256 = dma.done [#allocation6], 1024
        $region48: #{tpu_custom_call.1} parent=35 // pred_fallthru
          _
        // Predicated region
        $region49: #{tpu_custom_call.1} parent=35 // pred_check
          %p257 = pneg %p114
        $region50: #{tpu_custom_call.1} parent=35 // pred_check_branch
          %259 = sbr.rel (%p257) target = $region52
        $region51: #{tpu_custom_call.1} parent=35 // pred_region
          %261 = dma.done [#allocation9], 1024
        $region52: #{tpu_custom_call.1} parent=35 // pred_fallthru
          _
        %s262 = sand.u32 %s33, 1
        %s263 = scalar_lea.sflag [#allocation3], %s262
        %s264 = sand.u32 %s33, 1
        %s265 = smul.addr %s264, 8
        %s266 = scalar_lea.vmem [#allocation2], %s265
        %p267 = pneg %p46
        %p268 = pneg %p43
        %s269 = sand.u32 %s25, 1
        %s270 = scalar_lea.sflag [#allocation6], %s269
        %s271 = sand.u32 %s59, 1
        %s272 = smul.addr %s271, 8
        %s273 = scalar_lea.vmem [#allocation5], %s272
        %p274 = pneg %p72
        %p275 = pneg %p69
        %p276 = pneg %p93
        %p277 = pneg %p90
        %p278 = pneg %p114
        %p279 = pneg %p111
        %p280 = pneg %p140
        %p281 = pneg %p137
        %s282 = sand.u32 %s127, 1
        %s283 = scalar_lea.sflag [#allocation4], %s282
        %s284 = sand.u32 %s127, 1
        %s285 = smul.addr %s284, 8
        %s286 = scalar_lea.vmem [#allocation10], %s285
        %v287 = vld [vmem:[%s246] sm:$0xff]
        %v288 = vld [vmem:[#allocation7] sm:$0xff]
        %v289 = vld [vmem:[#allocation7 + $0x8] sm:$0xff]
        %v290 = vld [vmem:[#allocation7 + $0x10] sm:$0xff]
        %v291 = vld [vmem:[#allocation7 + $0x18] sm:$0xff]
        %v292 = vld [vmem:[#allocation7 + $0x20] sm:$0xff]
        %v293 = vld [vmem:[#allocation7 + $0x28] sm:$0xff]
        %v294 = vld [vmem:[#allocation7 + $0x30] sm:$0xff]
        %v295 = vld [vmem:[#allocation7 + $0x38] sm:$0xff]
        %vm296 = vcmask 523264
        %v298 = vsel %vm296, %v287, 0
        %300 = vmatpush.msra.mxu0 0.0
        %301 = vmatpush.msra.mxu0 0.0
        %302 = vmatpush.msra.mxu0 0.0
        %303 = vmatpush.msra.mxu0 0.0
        %304 = vmatpush.msra.mxu0 0.0
        %305 = vmatpush.msra.mxu0 0.0
        %306 = vmatpush.msra.mxu0 0.0
        %307 = vmatpush.msra.mxu0 0.0
        %308 = vmatpush.msra.mxu0 %v295
        %309 = vmatpush.msra.mxu0 %v294
        %310 = vmatpush.msra.mxu0 %v293
        %311 = vmatpush.msra.mxu0 %v292
        %312 = vmatpush.msra.mxu0 %v291
        %313 = vmatpush.msra.mxu0 %v290
        %314 = vmatpush.msra.mxu0 %v289
        %315 = vmatpush.msra.mxu0 %v288
        %316 = vmatmul.f32.gmra.mxu0 %v298
        %v317 = vpop.f32.mrf.mxu0
        %v318 = vadd.f32 0.0, %v317
        %319 = vdwg.mxu0
        %v320 = vld [vmem:[#allocation8] sm:$0xff]
        %v321 = vld [vmem:[#allocation8 + $0x8] sm:$0xff]
        %v322 = vld [vmem:[#allocation8 + $0x10] sm:$0xff]
        %v323 = vld [vmem:[#allocation8 + $0x18] sm:$0xff]
        %v324 = vld [vmem:[#allocation8 + $0x20] sm:$0xff]
        %v325 = vld [vmem:[#allocation8 + $0x28] sm:$0xff]
        %v326 = vld [vmem:[#allocation8 + $0x30] sm:$0xff]
        %v327 = vld [vmem:[#allocation8 + $0x38] sm:$0xff]
        %328 = vmatpush.msra.mxu0 0.0
        %329 = vmatpush.msra.mxu0 0.0
        %330 = vmatpush.msra.mxu0 0.0
        %331 = vmatpush.msra.mxu0 0.0
        %332 = vmatpush.msra.mxu0 0.0
        %333 = vmatpush.msra.mxu0 0.0
        %334 = vmatpush.msra.mxu0 0.0
        %335 = vmatpush.msra.mxu0 0.0
        %336 = vmatpush.msra.mxu0 %v327
        %337 = vmatpush.msra.mxu0 %v326
        %338 = vmatpush.msra.mxu0 %v325
        %339 = vmatpush.msra.mxu0 %v324
        %340 = vmatpush.msra.mxu0 %v323
        %341 = vmatpush.msra.mxu0 %v322
        %342 = vmatpush.msra.mxu0 %v321
        %343 = vmatpush.msra.mxu0 %v320
        %344 = vmatmul.f32.gmra.mxu0 %v298
        %v345 = vpop.f32.mrf.mxu0
        %v346 = vadd.f32 0.0, %v345
        %347 = vdwg.mxu0
        %v348 = vld [vmem:[%s236] sm:$0xff]
        %v349 = vmul.f32 %v348, %v318
        %v350 = vadd.f32 %v349, %v348
        %v351 = vadd.f32 %v350, %v346
        %352 = vst [vmem:[%s286] sm:$0xff] %v351
        %s353 = sand.u32 %s127, 1
        %s354 = scalar_lea.sflag [#allocation4], %s353
        %s355 = sand.u32 %s127, 1
        %s356 = smul.addr %s355, 8
        %s357 = scalar_lea.vmem [#allocation10], %s356
        // Predicated region
        $region53: #{tpu_custom_call.1} parent=35 // pred_check
          %p358 = pneg %p137
        $region54: #{tpu_custom_call.1} parent=35 // pred_check_branch
          %360 = sbr.rel (%p358) target = $region56
        $region55: #{tpu_custom_call.1} parent=35 // pred_region
          %362 = vsyncadd %s354, 0
          %s363 = smul.addr %s25, 8
          %s364 = scalar_lea.hbm %s4, %s363
          %s366 = sshll.u32 %s357, 4
          %s367 = int_to_ptr.vmem [resolvable:$true] %s366
          %s368 = sshll.u32 %s364, 4
          %s369 = int_to_ptr.hbm [resolvable:$true] %s368
          %371 = dma.vmem_to_hbm [thread:$0]  %s367, 128, %s369, %s354
        $region56: #{tpu_custom_call.1} parent=35 // pred_fallthru
          _
      $region36: #{tpu_custom_call.1} parent=5 // pred_fallthru
        _
      %p372 = scmp.le.s32.totalorder 2, %s20
      // Predicated region
      $region57: #{tpu_custom_call.1} parent=5 // pred_check
        %p373 = pneg %p372
      $region58: #{tpu_custom_call.1} parent=5 // pred_check_branch
        %375 = sbr.rel (%p373) target = $region60
      $region59: #{tpu_custom_call.1} parent=5 // pred_region
        %s376 = ssub.s32 %s20, 2
        // Predicated region
        $region61: #{tpu_custom_call.1} parent=59 // pred_check
          %p377 = pneg %p143
        $region62: #{tpu_custom_call.1} parent=59 // pred_check_branch
          %379 = sbr.rel (%p377) target = $region64
        $region63: #{tpu_custom_call.1} parent=59 // pred_region
          %s380 = sand.u32 %s128, 1
          %s381 = scalar_lea.sflag [#allocation4], %s380
          %s382 = sand.u32 %s128, 1
          %s383 = smul.addr %s382, 8
          %s384 = scalar_lea.vmem [#allocation10], %s383
          %386 = dma.done %s381, 128
        $region64: #{tpu_custom_call.1} parent=59 // pred_fallthru
          _
      $region60: #{tpu_custom_call.1} parent=5 // pred_fallthru
        _
    $region6: #{tpu_custom_call.1} parent=1 // loop_footer
      %s24 = sadd.s32 1, %s20
    $region7: #{tpu_custom_call.1} parent=1 // loop_footer_branch
      %19 = sbr.rel target = $region3
    $region8: #{tpu_custom_call.1} parent=1 // loop_exit
      _
    %387 = vsyncpa [#allocation3], 1
    %s388 = scalar_lea.sflag [#allocation3], 1
    %389 = vsyncpa %s388, 1
    %390 = vsyncpa [#allocation6], 1
    %s391 = scalar_lea.sflag [#allocation6], 1
    %392 = vsyncpa %s391, 1
    %393 = vsyncpa [#allocation9], 1
    %394 = vsyncpa [#allocation4], 1
    %s395 = scalar_lea.sflag [#allocation4], 1
    %396 = vsyncpa %s395, 1

</llo_original>
